<compile_context>
chip_gen: v6e
topology: v6e:2x2x1
jax: 0.10.0
libtpu: 0.0.40
codegen_flags: <defaults>
</compile_context>

<pallas_src>
import jax
import jax.numpy as jnp
from jax.experimental import pallas as pl
from jax.experimental.pallas import tpu as pltpu


def _softplus(x):
    # Stable softplus without logaddexp's NaN-propagation selects.
    return jnp.maximum(x, 0) + jnp.log1p(jnp.exp(-jnp.abs(x)))


def diag_variance_kernel(yT_ref, tT_ref, w1yT_ref, w1tT_ref, b1T_ref,
                         w2T_ref, b2T_ref, oT_ref):
    """Fused forward of all per-dimension variance MLPs, batch on the lane axis.

    yT_ref  : (G, Bblk)        y^T
    tT_ref  : (T, Bblk)        t^T (shared time embedding)
    w1yT_ref: (G*H, G)         layer-1 y-weights, block-diagonal (transposed)
    w1tT_ref: (G*H, T)         layer-1 t-weights, dense (transposed)
    b1T_ref : (G*H, 1)   f32
    w2T_ref : (G*Dout, G*H)    layer-2 weights, block-diagonal (transposed)
    b2T_ref : (G*Dout, 1) f32
    oT_ref  : (G*Dout, Bblk)   output^T, rows in torch.cat order (g*Dout + d)
    """
    cdt = w2T_ref.dtype   # compute dtype for MXU operands / hidden softplus
    # Layer 1: two MXU dots (y-part + t-part) replace the wrapper-side concat;
    # both accumulate in f32.
    h = jnp.dot(w1yT_ref[...], yT_ref[...], preferred_element_type=jnp.float32)
    h = h + jnp.dot(w1tT_ref[...], tT_ref[...], preferred_element_type=jnp.float32)
    h = h + b1T_ref[...]
    # Hidden softplus in the compute dtype (bf16 halves EUP work on v6e/v7x).
    h = _softplus(h.astype(cdt))
    # Layer 2 (block-diagonal) + final DiagonalVariance softplus in f32.
    o = jnp.dot(w2T_ref[...], h, preferred_element_type=jnp.float32)
    o = o + b2T_ref[...]
    oT_ref[...] = _softplus(o).astype(oT_ref.dtype)


def pack_params(params, compute_dtype=jnp.float32):
    """Pack per-network weights once (hoisted out of the per-call path).

    Hidden column order is g*H + h, output row order g*Dout + d, so the kernel
    output transposes directly into torch.cat(..., dim=1) order.
    """
    w1, b1, w2, b2 = params["w1"], params["b1"], params["w2"], params["b2"]
    G, din, H = w1.shape
    T = din - 1
    Dout = w2.shape[-1]
    eye = jnp.eye(G, dtype=w1.dtype)
    # Layer 1, y column: block-diagonal -- network g's hidden block sees only y_g.
    w1yT = jnp.einsum("gh,gk->ghk", w1[:, 0, :], eye).reshape(G * H, G)
    # Layer 1, t columns: shared by every network -> dense.
    w1tT = jnp.transpose(w1[:, 1:, :], (0, 2, 1)).reshape(G * H, T)
    # Layer 2: block-diagonal, transposed (row g*Dout+d, col g*H+h).
    w2T = jnp.einsum("ghd,gk->gdkh", w2, eye).reshape(G * Dout, G * H)
    # TODO(synk): for large input_dim (G >~ 32) the zero-padded block-diagonal
    # slabs grow O(G^2); move the per-network axis onto the grid instead.
    return {
        "w1yT": w1yT.astype(compute_dtype),
        "w1tT": w1tT.astype(compute_dtype),
        "b1T": b1.reshape(G * H, 1).astype(jnp.float32),
        "w2T": w2T.astype(compute_dtype),
        "b2T": b2.reshape(G * Dout, 1).astype(jnp.float32),
    }


def _pick_batch_tile(B, bytes_per_col, *, vmem_budget_bytes=16 << 20,
                     max_tile=16384):
    """Choose the lane-axis (batch) tile.  Returns (b_blk, B_pad, num_tiles)."""
    if B <= 128:
        # Tiny batch: one step, full-extent lane block (always a legal BlockSpec).
        return B, B, 1
    groups = -(-B // 128)                                    # 128-lane groups
    limit_cols = max(128, min(max_tile,
                              vmem_budget_bytes // max(bytes_per_col, 1)))
    g = max(1, min(limit_cols // 128, groups))
    # Keep >=2 grid steps once each per-core tile stays lane-dense (>=128
    # columns): lets v7x's two TensorCores both get work.  Below 256 rows the
    # kernel is launch-bound and splitting would only produce masked stores.
    if groups >= 2 and g >= groups:
        g = -(-groups // 2)
    b_blk = g * 128
    num_tiles = -(-groups // g)
    return b_blk, num_tiles * b_blk, num_tiles


def diagonal_variance(t, y, packed):
    """Forward pass of DiagonalVariance.

    t: (B, time_embedding_dim), y: (B, input_dim), packed: from pack_params().
    returns (B, input_dim * Dout) f32, matching torch.cat(..., dim=1) ordering.
    """
    G = packed["w1yT"].shape[1]
    GH, T = packed["w1tT"].shape
    H = GH // G
    Dout = packed["w2T"].shape[0] // G
    assert y.shape[1] == G and t.shape[1] == T
    B = y.shape[0]
    cdt = packed["w2T"].dtype
    item = jnp.dtype(cdt).itemsize

    # VMEM cost per batch column: double-buffered y^T/t^T/o^T tiles plus the
    # (G*H, Bblk) hidden pre/post-activation temporaries.
    bytes_per_col = (2 * (G + T) * item + 2 * (G * Dout) * 4
                     + (G * H) * (2 * 4 + item))
    b_blk, B_pad, nb = _pick_batch_tile(B, bytes_per_col)

    # Batch-on-lanes layout (layout plumbing only; tiny arrays).
    yT = y.T.astype(cdt)
    tT = t.T.astype(cdt)
    if B_pad != B:
        yT = jnp.pad(yT, ((0, 0), (0, B_pad - B)))
        tT = jnp.pad(tT, ((0, 0), (0, B_pad - B)))

    outT = pl.pallas_call(
        diag_variance_kernel,
        out_shape=jax.ShapeDtypeStruct((G * Dout, B_pad), jnp.float32),
        grid_spec=pltpu.PrefetchScalarGridSpec(
            num_scalar_prefetch=0,
            grid=(nb,),
            in_specs=[
                pl.BlockSpec((G, b_blk), lambda i: (0, i)),         # y^T tile
                pl.BlockSpec((T, b_blk), lambda i: (0, i)),         # t^T tile
                pl.BlockSpec((G * H, G), lambda i: (0, 0)),         # W1_y (resident)
                pl.BlockSpec((G * H, T), lambda i: (0, 0)),         # W1_t (resident)
                pl.BlockSpec((G * H, 1), lambda i: (0, 0)),         # b1
                pl.BlockSpec((G * Dout, G * H), lambda i: (0, 0)),  # W2 block-diag
                pl.BlockSpec((G * Dout, 1), lambda i: (0, 0)),      # b2
            ],
            out_specs=pl.BlockSpec((G * Dout, b_blk), lambda i: (0, i)),
        ),
        compiler_params=pltpu.CompilerParams(
            dimension_semantics=("parallel",),
            vmem_limit_bytes=32 * 1024 * 1024,
        ),
    )(yT, tT, packed["w1yT"], packed["w1tT"], packed["b1T"],
      packed["w2T"], packed["b2T"])

    return outT[:, :B].T


def init_params(key, input_dim, time_embedding_dim, model_dims):
    """Deterministic init mimicking nn.Linear (uniform +/- 1/sqrt(fan_in))."""
    assert len(model_dims) == 2, "this script implements [hidden, out] model_dims"
    din = 1 + time_embedding_dim
    hidden, dout = model_dims
    k1, k2, k3, k4 = jax.random.split(key, 4)
    lim1 = 1.0 / jnp.sqrt(din)
    lim2 = 1.0 / jnp.sqrt(hidden)
    return {
        "w1": jax.random.uniform(k1, (input_dim, din, hidden), jnp.float32, -lim1, lim1),
        "b1": jax.random.uniform(k2, (input_dim, 1, hidden), jnp.float32, -lim1, lim1),
        "w2": jax.random.uniform(k3, (input_dim, hidden, dout), jnp.float32, -lim2, lim2),
        "b2": jax.random.uniform(k4, (input_dim, 1, dout), jnp.float32, -lim2, lim2),
    }


def reference(t, y, params):
    """Plain-JAX reference replicating the PyTorch forward."""
    w1, b1, w2, b2 = params["w1"], params["b1"], params["w2"], params["b2"]
    input_dim = w1.shape[0]
    outs = []
    for i in range(input_dim):
        x = jnp.concatenate([y[:, i:i + 1], t], axis=1)
        h = _softplus(x @ w1[i] + b1[i])
        outs.append(h @ w2[i] + b2[i])
    return _softplus(jnp.concatenate(outs, axis=1))


if __name__ == "__main__":
    key = jax.random.PRNGKey(0)
    B = 8
    input_dim = 4
    time_embedding_dim = 3
    model_dims = [32, 1]

    kp, ky, kt = jax.random.split(key, 3)
    params = init_params(kp, input_dim, time_embedding_dim, model_dims)
    y = jax.random.normal(ky, (B, input_dim), jnp.float32)
    t = jax.random.normal(kt, (B, time_embedding_dim), jnp.float32)

    ref = reference(t, y, params)
    fwd = jax.jit(diagonal_variance)

    # f32 path: strict check against the PyTorch-equivalent reference.
    packed = pack_params(params, compute_dtype=jnp.float32)
    out = jax.block_until_ready(fwd(t, y, packed))
    assert out.shape == (B, input_dim * model_dims[-1]), out.shape
    assert jnp.allclose(out, ref, atol=1e-5, rtol=1e-5), "f32 kernel mismatch"

    # bf16 MXU-operand / hidden-softplus path (EUP relief on v6e/v7x); looser
    # tolerance against the f32 reference per the numerics caveat.
    packed_bf16 = pack_params(params, compute_dtype=jnp.bfloat16)
    out_bf16 = jax.block_until_ready(fwd(t, y, packed_bf16))
    assert jnp.allclose(out_bf16, ref, atol=5e-2, rtol=5e-2), "bf16 kernel mismatch"

    print("KERNEL_OK")
</pallas_src>

<mosaic_0001>
module attributes {stable_mosaic.version = 11 : i64} {
  func.func @diag_variance_kernel(%arg0: i32, %arg1: memref<4x8xf32, #tpu.memory_space<vmem>>, %arg2: memref<3x8xf32, #tpu.memory_space<vmem>>, %arg3: memref<128x4xf32, #tpu.memory_space<vmem>>, %arg4: memref<128x3xf32, #tpu.memory_space<vmem>>, %arg5: memref<128x1xf32, #tpu.memory_space<vmem>>, %arg6: memref<4x128xf32, #tpu.memory_space<vmem>>, %arg7: memref<4x1xf32, #tpu.memory_space<vmem>>, %arg8: memref<4x8xf32, #tpu.memory_space<vmem>>) attributes {dimension_semantics = [#tpu.dimension_semantics<parallel>], iteration_bounds = array<i64: 1>, scalar_prefetch = 0 : i64, scratch_operands = 0 : i64, tpu.core_type = #tpu.core_type<tc>, window_params = [{transform_indices = @transform_0, window_bounds = array<i64: 4, 8>}, {transform_indices = @transform_1, window_bounds = array<i64: 3, 8>}, {pipeline_mode = #tpu.pipeline_mode<synchronous>, transform_indices = @transform_2, window_bounds = array<i64: 128, 4>}, {pipeline_mode = #tpu.pipeline_mode<synchronous>, transform_indices = @transform_3, window_bounds = array<i64: 128, 3>}, {pipeline_mode = #tpu.pipeline_mode<synchronous>, transform_indices = @transform_4, window_bounds = array<i64: 128, 1>}, {pipeline_mode = #tpu.pipeline_mode<synchronous>, transform_indices = @transform_5, window_bounds = array<i64: 4, 128>}, {pipeline_mode = #tpu.pipeline_mode<synchronous>, transform_indices = @transform_6, window_bounds = array<i64: 4, 1>}, {transform_indices = @transform_7, window_bounds = array<i64: 4, 8>}]} {
    %c0 = arith.constant 0 : index
    %c0_0 = arith.constant 0 : index
    %0 = vector.load %arg3[%c0, %c0_0] : memref<128x4xf32, #tpu.memory_space<vmem>>, vector<128x4xf32>
    %c0_1 = arith.constant 0 : index
    %c0_2 = arith.constant 0 : index
    %1 = vector.load %arg1[%c0_1, %c0_2] : memref<4x8xf32, #tpu.memory_space<vmem>>, vector<4x8xf32>
    %cst = arith.constant dense<0.000000e+00> : vector<128x8xf32>
    %2 = tpu.matmul %0, %1, %cst {dimension_numbers = #tpu.dot_dimension_numbers<[1], [0], [0], [1], [0, 0, 1, 1], [], []>} : vector<128x4xf32>, vector<4x8xf32>, vector<128x8xf32> -> vector<128x8xf32>
    %c0_3 = arith.constant 0 : index
    %c0_4 = arith.constant 0 : index
    %3 = vector.load %arg4[%c0_3, %c0_4] : memref<128x3xf32, #tpu.memory_space<vmem>>, vector<128x3xf32>
    %c0_5 = arith.constant 0 : index
    %c0_6 = arith.constant 0 : index
    %4 = vector.load %arg2[%c0_5, %c0_6] : memref<3x8xf32, #tpu.memory_space<vmem>>, vector<3x8xf32>
    %cst_7 = arith.constant dense<0.000000e+00> : vector<128x8xf32>
    %5 = tpu.matmul %3, %4, %cst_7 {dimension_numbers = #tpu.dot_dimension_numbers<[1], [0], [0], [1], [0, 0, 1, 1], [], []>} : vector<128x3xf32>, vector<3x8xf32>, vector<128x8xf32> -> vector<128x8xf32>
    %6 = arith.addf %2, %5 : vector<128x8xf32>
    %c0_8 = arith.constant 0 : index
    %c0_9 = arith.constant 0 : index
    %7 = vector.load %arg5[%c0_8, %c0_9] : memref<128x1xf32, #tpu.memory_space<vmem>>, vector<128x1xf32>
    %8 = vector.broadcast %7 : vector<128x1xf32> to vector<128x8xf32>
    %9 = arith.addf %6, %8 : vector<128x8xf32>
    %cst_10 = arith.constant 0.000000e+00 : f32
    %10 = vector.broadcast %cst_10 : f32 to vector<128x8xf32>
    %11 = arith.maximumf %9, %10 : vector<128x8xf32>
    %12 = math.absf %9 : vector<128x8xf32>
    %cst_11 = arith.constant 0.000000e+00 : f32
    %13 = vector.broadcast %cst_11 : f32 to vector<128x8xf32>
    %14 = arith.subf %13, %12 : vector<128x8xf32>
    %15 = math.exp %14 : vector<128x8xf32>
    %16 = math.log1p %15 : vector<128x8xf32>
    %17 = arith.addf %11, %16 : vector<128x8xf32>
    %c0_12 = arith.constant 0 : index
    %c0_13 = arith.constant 0 : index
    %18 = vector.load %arg6[%c0_12, %c0_13] : memref<4x128xf32, #tpu.memory_space<vmem>>, vector<4x128xf32>
    %cst_14 = arith.constant dense<0.000000e+00> : vector<4x8xf32>
    %19 = tpu.matmul %18, %17, %cst_14 {dimension_numbers = #tpu.dot_dimension_numbers<[1], [0], [0], [1], [0, 0, 1, 1], [], []>} : vector<4x128xf32>, vector<128x8xf32>, vector<4x8xf32> -> vector<4x8xf32>
    %c0_15 = arith.constant 0 : index
    %c0_16 = arith.constant 0 : index
    %20 = vector.load %arg7[%c0_15, %c0_16] : memref<4x1xf32, #tpu.memory_space<vmem>>, vector<4x1xf32>
    %21 = vector.broadcast %20 : vector<4x1xf32> to vector<4x8xf32>
    %22 = arith.addf %19, %21 : vector<4x8xf32>
    %cst_17 = arith.constant 0.000000e+00 : f32
    %23 = vector.broadcast %cst_17 : f32 to vector<4x8xf32>
    %24 = arith.maximumf %22, %23 : vector<4x8xf32>
    %25 = math.absf %22 : vector<4x8xf32>
    %cst_18 = arith.constant 0.000000e+00 : f32
    %26 = vector.broadcast %cst_18 : f32 to vector<4x8xf32>
    %27 = arith.subf %26, %25 : vector<4x8xf32>
    %28 = math.exp %27 : vector<4x8xf32>
    %29 = math.log1p %28 : vector<4x8xf32>
    %30 = arith.addf %24, %29 : vector<4x8xf32>
    %c0_19 = arith.constant 0 : index
    %c0_20 = arith.constant 0 : index
    %31 = vector.load %arg8[%c0_19, %c0_20] : memref<4x8xf32, #tpu.memory_space<vmem>>, vector<4x8xf32>
    tpu.vector_store %arg8[%c0_19, %c0_20], %30 {strides = array<i32>} : memref<4x8xf32, #tpu.memory_space<vmem>>, vector<4x8xf32>,
    return
  }
  func.func @transform_0(%arg0: i32) -> (i32, i32) {
    %c0_i32 = arith.constant 0 : i32
    %c0_i32_0 = arith.constant 0 : i32
    return %c0_i32, %arg0 : i32, i32
  }
  func.func @transform_1(%arg0: i32) -> (i32, i32) {
    %c0_i32 = arith.constant 0 : i32
    %c0_i32_0 = arith.constant 0 : i32
    return %c0_i32, %arg0 : i32, i32
  }
  func.func @transform_2(%arg0: i32) -> (i32, i32) {
    %c0_i32 = arith.constant 0 : i32
    %c0_i32_0 = arith.constant 0 : i32
    %c0_i32_1 = arith.constant 0 : i32
    return %c0_i32, %c0_i32_0 : i32, i32
  }
  func.func @transform_3(%arg0: i32) -> (i32, i32) {
    %c0_i32 = arith.constant 0 : i32
    %c0_i32_0 = arith.constant 0 : i32
    %c0_i32_1 = arith.constant 0 : i32
    return %c0_i32, %c0_i32_0 : i32, i32
  }
  func.func @transform_4(%arg0: i32) -> (i32, i32) {
    %c0_i32 = arith.constant 0 : i32
    %c0_i32_0 = arith.constant 0 : i32
    %c0_i32_1 = arith.constant 0 : i32
    return %c0_i32, %c0_i32_0 : i32, i32
  }
  func.func @transform_5(%arg0: i32) -> (i32, i32) {
    %c0_i32 = arith.constant 0 : i32
    %c0_i32_0 = arith.constant 0 : i32
    %c0_i32_1 = arith.constant 0 : i32
    return %c0_i32, %c0_i32_0 : i32, i32
  }
  func.func @transform_6(%arg0: i32) -> (i32, i32) {
    %c0_i32 = arith.constant 0 : i32
    %c0_i32_0 = arith.constant 0 : i32
    %c0_i32_1 = arith.constant 0 : i32
    return %c0_i32, %c0_i32_0 : i32, i32
  }
  func.func @transform_7(%arg0: i32) -> (i32, i32) {
    %c0_i32 = arith.constant 0 : i32
    %c0_i32_0 = arith.constant 0 : i32
    return %c0_i32, %arg0 : i32, i32
  }
}

</mosaic_0001>

<llo_original>
// kernel: diagonal_variance.1
$region0: #{diagonal_variance.1}
  #allocation0 [shape = 'u32[]', space=smem, size = 0x4, offset = 0x4, fixed_abs, tag = 'smem constant byte address 0x4 - core index']
  #allocation1 [shape = 'u32[144,128]{1,0:T(1,128)}', space=vmem, size = 0x12000, scoped, tag = 'internal scratch']
  %s0 = inlined_call_operand.vmem [shape: f32[4,8], index: 0, kind: input, shape index: {}]
  %s1 = inlined_call_operand.vmem [shape: f32[3,8], index: 1, kind: input, shape index: {}]
  %s2 = inlined_call_operand.vmem [shape: f32[128,4], index: 2, kind: input, shape index: {}]
  %s3 = inlined_call_operand.vmem [shape: f32[128,3], index: 3, kind: input, shape index: {}]
  %s4 = inlined_call_operand.vmem [shape: f32[128,1], index: 4, kind: input, shape index: {}]
  %s5 = inlined_call_operand.vmem [shape: f32[4,128], index: 5, kind: input, shape index: {}]
  %s6 = inlined_call_operand.vmem [shape: f32[4,1], index: 6, kind: input, shape index: {}]
  %s7 = inlined_call_operand.hbm [shape: f32[4,8], index: 7, kind: output, shape index: {}]
  %s8 = sld [smem:[#allocation0]]
  $region38: #{diagonal_variance.1} parent=0
    _
  %s10 = ssub.s32 1, %s8
  %s11 = scalar_select 0, %s10, %s8
  $region1: #{diagonal_variance.1} parent=0
    #allocation2 [shape = 'u8[2048]{0}', space=vmem, size = 0x800, scoped, tag = 'output window, operand 0, single buffered']
    #allocation3 [shape = 's32[1]{0}', space=sflag, size = 0x4, scoped, tag = 'scoped memory for diagonal_variance.1']
    %12 = vsyncpa [#allocation3], 0
    // Predicated region
    $region2: #{diagonal_variance.1} parent=1 // pred_check
      _
    $region3: #{diagonal_variance.1} parent=1 // pred_check_branch
      %14 = sbr.rel (0) target = $region5
    $region4: #{diagonal_variance.1} parent=1 // pred_region
      _
    $region5: #{diagonal_variance.1} parent=1 // pred_fallthru
      _
    // Predicated region
    $region6: #{diagonal_variance.1} parent=1 // pred_check
      _
    $region7: #{diagonal_variance.1} parent=1 // pred_check_branch
      %16 = sbr.rel (0) target = $region9
    $region8: #{diagonal_variance.1} parent=1 // pred_region
      _
    $region9: #{diagonal_variance.1} parent=1 // pred_fallthru
      _
    // Predicated region
    $region10: #{diagonal_variance.1} parent=1 // pred_check
      _
    $region11: #{diagonal_variance.1} parent=1 // pred_check_branch
      %18 = sbr.rel (0) target = $region13
    $region12: #{diagonal_variance.1} parent=1 // pred_region
      _
    $region13: #{diagonal_variance.1} parent=1 // pred_fallthru
      _
    // Predicated region
    $region14: #{diagonal_variance.1} parent=1 // pred_check
      _
    $region15: #{diagonal_variance.1} parent=1 // pred_check_branch
      %20 = sbr.rel (0) target = $region17
    $region16: #{diagonal_variance.1} parent=1 // pred_region
      _
    $region17: #{diagonal_variance.1} parent=1 // pred_fallthru
      _
    // Predicated region
    $region18: #{diagonal_variance.1} parent=1 // pred_check
      _
    $region19: #{diagonal_variance.1} parent=1 // pred_check_branch
      %22 = sbr.rel (0) target = $region21
    $region20: #{diagonal_variance.1} parent=1 // pred_region
      _
    $region21: #{diagonal_variance.1} parent=1 // pred_fallthru
      _
    // Predicated region
    $region22: #{diagonal_variance.1} parent=1 // pred_check
      _
    $region23: #{diagonal_variance.1} parent=1 // pred_check_branch
      %24 = sbr.rel (0) target = $region25
    $region24: #{diagonal_variance.1} parent=1 // pred_region
      _
    $region25: #{diagonal_variance.1} parent=1 // pred_fallthru
      _
    // Predicated region
    $region26: #{diagonal_variance.1} parent=1 // pred_check
      _
    $region27: #{diagonal_variance.1} parent=1 // pred_check_branch
      %26 = sbr.rel (0) target = $region29
    $region28: #{diagonal_variance.1} parent=1 // pred_region
      _
    $region29: #{diagonal_variance.1} parent=1 // pred_fallthru
      _
    %v27 = vld [vmem:[%s2] sm:$0xff]
    %v28 = vld [vmem:[%s2 + $0x8] sm:$0xff]
    %v29 = vld [vmem:[%s2 + $0x10] sm:$0xff]
    %v30 = vld [vmem:[%s2 + $0x18] sm:$0xff]
    %v31 = vld [vmem:[%s2 + $0x20] sm:$0xff]
    %v32 = vld [vmem:[%s2 + $0x28] sm:$0xff]
    %v33 = vld [vmem:[%s2 + $0x30] sm:$0xff]
    %v34 = vld [vmem:[%s2 + $0x38] sm:$0xff]
    %v35 = vld [vmem:[%s2 + $0x40] sm:$0xff]
    %v36 = vld [vmem:[%s2 + $0x48] sm:$0xff]
    %v37 = vld [vmem:[%s2 + $0x50] sm:$0xff]
    %v38 = vld [vmem:[%s2 + $0x58] sm:$0xff]
    %v39 = vld [vmem:[%s2 + $0x60] sm:$0xff]
    %v40 = vld [vmem:[%s2 + $0x68] sm:$0xff]
    %v41 = vld [vmem:[%s2 + $0x70] sm:$0xff]
    %v42 = vld [vmem:[%s2 + $0x78] sm:$0xff]
    %v43 = vld [vmem:[%s0] sm:$0xf]
    %v44 = vld [vmem:[%s3] sm:$0xff]
    %v45 = vld [vmem:[%s3 + $0x8] sm:$0xff]
    %v46 = vld [vmem:[%s3 + $0x10] sm:$0xff]
    %v47 = vld [vmem:[%s3 + $0x18] sm:$0xff]
    %v48 = vld [vmem:[%s3 + $0x20] sm:$0xff]
    %v49 = vld [vmem:[%s3 + $0x28] sm:$0xff]
    %v50 = vld [vmem:[%s3 + $0x30] sm:$0xff]
    %v51 = vld [vmem:[%s3 + $0x38] sm:$0xff]
    %v52 = vld [vmem:[%s3 + $0x40] sm:$0xff]
    %v53 = vld [vmem:[%s3 + $0x48] sm:$0xff]
    %v54 = vld [vmem:[%s3 + $0x50] sm:$0xff]
    %v55 = vld [vmem:[%s3 + $0x58] sm:$0xff]
    %v56 = vld [vmem:[%s3 + $0x60] sm:$0xff]
    %v57 = vld [vmem:[%s3 + $0x68] sm:$0xff]
    %v58 = vld [vmem:[%s3 + $0x70] sm:$0xff]
    %v59 = vld [vmem:[%s3 + $0x78] sm:$0xff]
    %v60 = vld [vmem:[%s1] sm:$0x7]
    %vm61 = vcmask 23552
    %v63 = vsel %vm61, %v44, 0
    %v66 = vsel %vm61, %v45, 0
    %v69 = vsel %vm61, %v46, 0
    %v72 = vsel %vm61, %v47, 0
    %v75 = vsel %vm61, %v48, 0
    %v78 = vsel %vm61, %v49, 0
    %v81 = vsel %vm61, %v50, 0
    %v84 = vsel %vm61, %v51, 0
    %v87 = vsel %vm61, %v52, 0
    %v90 = vsel %vm61, %v53, 0
    %v93 = vsel %vm61, %v54, 0
    %v96 = vsel %vm61, %v55, 0
    %v99 = vsel %vm61, %v56, 0
    %v102 = vsel %vm61, %v57, 0
    %v105 = vsel %vm61, %v58, 0
    %v108 = vsel %vm61, %v59, 0
    %vm110 = vcmask 1042432
    %v112 = vsel %vm110, %v60, 0
    %114 = vmatprep.subr.mxu0 0.0
    %115 = vmatpush1.msra.mxu0 0.0
    %116 = vmatprep.subr.mxu0 0.0
    %117 = vmatpush1.msra.mxu0 0.0
    %118 = vmatprep.subr.mxu0 0.0
    %119 = vmatpush1.msra.mxu0 0.0
    %120 = vmatprep.subr.mxu0 0.0
    %121 = vmatpush1.msra.mxu0 0.0
    %122 = vmatprep.subr.mxu0 0.0
    %123 = vmatpush1.msra.mxu0 0.0
    %124 = vmatprep.subr.mxu0 0.0
    %125 = vmatpush1.msra.mxu0 0.0
    %126 = vmatprep.subr.mxu0 0.0
    %127 = vmatpush1.msra.mxu0 0.0
    %128 = vmatprep.subr.mxu0 0.0
    %129 = vmatpush1.msra.mxu0 0.0
    %130 = vmatprep.subr.mxu0 0.0
    %131 = vmatpush1.msra.mxu0 0.0
    %132 = vmatprep.subr.mxu0 0.0
    %133 = vmatpush1.msra.mxu0 0.0
    %134 = vmatprep.subr.mxu0 0.0
    %135 = vmatpush1.msra.mxu0 0.0
    %136 = vmatprep.subr.mxu0 0.0
    %137 = vmatpush1.msra.mxu0 0.0
    %138 = vmatprep.subr.mxu0 0.0
    %139 = vmatpush1.msra.mxu0 0.0
    %140 = vmatprep.subr.mxu0 0.0
    %141 = vmatpush1.msra.mxu0 0.0
    %142 = vmatprep.subr.mxu0 0.0
    %143 = vmatpush1.msra.mxu0 0.0
    %144 = vmatprep.subr.mxu0 0.0
    %145 = vmatpush1.msra.mxu0 %v112
    %146 = vmatprep.subr.mxu0 0.0
    %147 = vmatpush2.msra.mxu0 0.0
    %148 = vmatprep.subr.mxu0 0.0
    %149 = vmatpush2.msra.mxu0 0.0
    %150 = vmatprep.subr.mxu0 0.0
    %151 = vmatpush2.msra.mxu0 0.0
    %152 = vmatprep.subr.mxu0 0.0
    %153 = vmatpush2.msra.mxu0 0.0
    %154 = vmatprep.subr.mxu0 0.0
    %155 = vmatpush2.msra.mxu0 0.0
    %156 = vmatprep.subr.mxu0 0.0
    %157 = vmatpush2.msra.mxu0 0.0
    %158 = vmatprep.subr.mxu0 0.0
    %159 = vmatpush2.msra.mxu0 0.0
    %160 = vmatprep.subr.mxu0 0.0
    %161 = vmatpush2.msra.mxu0 0.0
    %162 = vmatprep.subr.mxu0 0.0
    %163 = vmatpush2.msra.mxu0 0.0
    %164 = vmatprep.subr.mxu0 0.0
    %165 = vmatpush2.msra.mxu0 0.0
    %166 = vmatprep.subr.mxu0 0.0
    %167 = vmatpush2.msra.mxu0 0.0
    %168 = vmatprep.subr.mxu0 0.0
    %169 = vmatpush2.msra.mxu0 0.0
    %170 = vmatprep.subr.mxu0 0.0
    %171 = vmatpush2.msra.mxu0 0.0
    %172 = vmatprep.subr.mxu0 0.0
    %173 = vmatpush2.msra.mxu0 0.0
    %174 = vmatprep.subr.mxu0 0.0
    %175 = vmatpush2.msra.mxu0 0.0
    %176 = vmatprep.subr.mxu0 0.0
    %177 = vmatpush2.msra.mxu0 0.0
    %178 = vmatprep.mubr.f32.mxu0 0.0
    %179 = vmatmul.mubr.f32.gmra.mxu0 %v63
    %v180 = vpop.f32.mrf.mxu0
    %v181 = vadd.f32 0.0, %v180
    %v182 = vpop.f32.mrf.mxu0
    %183 = vmatprep.mubr.f32.mxu0 0.0
    %184 = vmatmul.mubr.f32.gmra.mxu0 %v66
    %v185 = vpop.f32.mrf.mxu0
    %v186 = vadd.f32 0.0, %v185
    %v187 = vpop.f32.mrf.mxu0
    %188 = vmatprep.mubr.f32.mxu0 0.0
    %189 = vmatmul.mubr.f32.gmra.mxu0 %v69
    %v190 = vpop.f32.mrf.mxu0
    %v191 = vadd.f32 0.0, %v190
    %v192 = vpop.f32.mrf.mxu0
    %193 = vmatprep.mubr.f32.mxu0 0.0
    %194 = vmatmul.mubr.f32.gmra.mxu0 %v72
    %v195 = vpop.f32.mrf.mxu0
    %v196 = vadd.f32 0.0, %v195
    %v197 = vpop.f32.mrf.mxu0
    %198 = vmatprep.mubr.f32.mxu0 0.0
    %199 = vmatmul.mubr.f32.gmra.mxu0 %v75
    %v200 = vpop.f32.mrf.mxu0
    %v201 = vadd.f32 0.0, %v200
    %v202 = vpop.f32.mrf.mxu0
    %203 = vmatprep.mubr.f32.mxu0 0.0
    %204 = vmatmul.mubr.f32.gmra.mxu0 %v78
    %v205 = vpop.f32.mrf.mxu0
    %v206 = vadd.f32 0.0, %v205
    %v207 = vpop.f32.mrf.mxu0
    %208 = vmatprep.mubr.f32.mxu0 0.0
    %209 = vmatmul.mubr.f32.gmra.mxu0 %v81
    %v210 = vpop.f32.mrf.mxu0
    %v211 = vadd.f32 0.0, %v210
    %v212 = vpop.f32.mrf.mxu0
    %213 = vmatprep.mubr.f32.mxu0 0.0
    %214 = vmatmul.mubr.f32.gmra.mxu0 %v84
    %v215 = vpop.f32.mrf.mxu0
    %v216 = vadd.f32 0.0, %v215
    %v217 = vpop.f32.mrf.mxu0
    %218 = vmatprep.mubr.f32.mxu0 0.0
    %219 = vmatmul.mubr.f32.gmra.mxu0 %v87
    %v220 = vpop.f32.mrf.mxu0
    %v221 = vadd.f32 0.0, %v220
    %v222 = vpop.f32.mrf.mxu0
    %223 = vmatprep.mubr.f32.mxu0 0.0
    %224 = vmatmul.mubr.f32.gmra.mxu0 %v90
    %v225 = vpop.f32.mrf.mxu0
    %v226 = vadd.f32 0.0, %v225
    %v227 = vpop.f32.mrf.mxu0
    %228 = vmatprep.mubr.f32.mxu0 0.0
    %229 = vmatmul.mubr.f32.gmra.mxu0 %v93
    %v230 = vpop.f32.mrf.mxu0
    %v231 = vadd.f32 0.0, %v230
    %v232 = vpop.f32.mrf.mxu0
    %233 = vmatprep.mubr.f32.mxu0 0.0
    %234 = vmatmul.mubr.f32.gmra.mxu0 %v96
    %v235 = vpop.f32.mrf.mxu0
    %v236 = vadd.f32 0.0, %v235
    %v237 = vpop.f32.mrf.mxu0
    %238 = vmatprep.mubr.f32.mxu0 0.0
    %239 = vmatmul.mubr.f32.gmra.mxu0 %v99
    %v240 = vpop.f32.mrf.mxu0
    %v241 = vadd.f32 0.0, %v240
    %v242 = vpop.f32.mrf.mxu0
    %243 = vmatprep.mubr.f32.mxu0 0.0
    %244 = vmatmul.mubr.f32.gmra.mxu0 %v102
    %v245 = vpop.f32.mrf.mxu0
    %v246 = vadd.f32 0.0, %v245
    %v247 = vpop.f32.mrf.mxu0
    %248 = vmatprep.mubr.f32.mxu0 0.0
    %249 = vmatmul.mubr.f32.gmra.mxu0 %v105
    %v250 = vpop.f32.mrf.mxu0
    %v251 = vadd.f32 0.0, %v250
    %v252 = vpop.f32.mrf.mxu0
    %253 = vmatprep.mubr.f32.mxu0 0.0
    %254 = vmatmul.mubr.f32.gmra.mxu0 %v108
    %v255 = vpop.f32.mrf.mxu0
    %v256 = vadd.f32 0.0, %v255
    %v257 = vpop.f32.mrf.mxu0
    %258 = vdwg.mxu0
    %vm259 = vcmask 31744
    %v261 = vsel %vm259, %v27, 0
    %v264 = vsel %vm259, %v28, 0
    %v267 = vsel %vm259, %v29, 0
    %v270 = vsel %vm259, %v30, 0
    %v273 = vsel %vm259, %v31, 0
    %v276 = vsel %vm259, %v32, 0
    %v279 = vsel %vm259, %v33, 0
    %v282 = vsel %vm259, %v34, 0
    %v285 = vsel %vm259, %v35, 0
    %v288 = vsel %vm259, %v36, 0
    %v291 = vsel %vm259, %v37, 0
    %v294 = vsel %vm259, %v38, 0
    %v297 = vsel %vm259, %v39, 0
    %v300 = vsel %vm259, %v40, 0
    %v303 = vsel %vm259, %v41, 0
    %v306 = vsel %vm259, %v42, 0
    %vm308 = vcmask 1043456
    %v310 = vsel %vm308, %v43, 0
    %312 = vmatprep.subr.mxu0 0.0
    %313 = vmatpush1.msra.mxu0 0.0
    %314 = vmatprep.subr.mxu0 0.0
    %315 = vmatpush1.msra.mxu0 0.0
    %316 = vmatprep.subr.mxu0 0.0
    %317 = vmatpush1.msra.mxu0 0.0
    %318 = vmatprep.subr.mxu0 0.0
    %319 = vmatpush1.msra.mxu0 0.0
    %320 = vmatprep.subr.mxu0 0.0
    %321 = vmatpush1.msra.mxu0 0.0
    %322 = vmatprep.subr.mxu0 0.0
    %323 = vmatpush1.msra.mxu0 0.0
    %324 = vmatprep.subr.mxu0 0.0
    %325 = vmatpush1.msra.mxu0 0.0
    %326 = vmatprep.subr.mxu0 0.0
    %327 = vmatpush1.msra.mxu0 0.0
    %328 = vmatprep.subr.mxu0 0.0
    %329 = vmatpush1.msra.mxu0 0.0
    %330 = vmatprep.subr.mxu0 0.0
    %331 = vmatpush1.msra.mxu0 0.0
    %332 = vmatprep.subr.mxu0 0.0
    %333 = vmatpush1.msra.mxu0 0.0
    %334 = vmatprep.subr.mxu0 0.0
    %335 = vmatpush1.msra.mxu0 0.0
    %336 = vmatprep.subr.mxu0 0.0
    %337 = vmatpush1.msra.mxu0 0.0
    %338 = vmatprep.subr.mxu0 0.0
    %339 = vmatpush1.msra.mxu0 0.0
    %340 = vmatprep.subr.mxu0 0.0
    %341 = vmatpush1.msra.mxu0 0.0
    %342 = vmatprep.subr.mxu0 0.0
    %343 = vmatpush1.msra.mxu0 %v310
    %344 = vmatprep.subr.mxu0 0.0
    %345 = vmatpush2.msra.mxu0 0.0
    %346 = vmatprep.subr.mxu0 0.0
    %347 = vmatpush2.msra.mxu0 0.0
    %348 = vmatprep.subr.mxu0 0.0
    %349 = vmatpush2.msra.mxu0 0.0
    %350 = vmatprep.subr.mxu0 0.0
    %351 = vmatpush2.msra.mxu0 0.0
    %352 = vmatprep.subr.mxu0 0.0
    %353 = vmatpush2.msra.mxu0 0.0
    %354 = vmatprep.subr.mxu0 0.0
    %355 = vmatpush2.msra.mxu0 0.0
    %356 = vmatprep.subr.mxu0 0.0
    %357 = vmatpush2.msra.mxu0 0.0
    %358 = vmatprep.subr.mxu0 0.0
    %359 = vmatpush2.msra.mxu0 0.0
    %360 = vmatprep.subr.mxu0 0.0
    %361 = vmatpush2.msra.mxu0 0.0
    %362 = vmatprep.subr.mxu0 0.0
    %363 = vmatpush2.msra.mxu0 0.0
    %364 = vmatprep.subr.mxu0 0.0
    %365 = vmatpush2.msra.mxu0 0.0
    %366 = vmatprep.subr.mxu0 0.0
    %367 = vmatpush2.msra.mxu0 0.0
    %368 = vmatprep.subr.mxu0 0.0
    %369 = vmatpush2.msra.mxu0 0.0
    %370 = vmatprep.subr.mxu0 0.0
    %371 = vmatpush2.msra.mxu0 0.0
    %372 = vmatprep.subr.mxu0 0.0
    %373 = vmatpush2.msra.mxu0 0.0
    %374 = vmatprep.subr.mxu0 0.0
    %375 = vmatpush2.msra.mxu0 0.0
    %376 = vmatprep.mubr.f32.mxu0 0.0
    %377 = vmatmul.mubr.f32.gmra.mxu0 %v261
    %v378 = vpop.f32.mrf.mxu0
    %v379 = vadd.f32 %v181, %v378
    %v380 = vpop.f32.mrf.mxu0
    %381 = vmatprep.mubr.f32.mxu0 0.0
    %382 = vmatmul.mubr.f32.gmra.mxu0 %v264
    %v383 = vpop.f32.mrf.mxu0
    %v384 = vadd.f32 %v186, %v383
    %v385 = vpop.f32.mrf.mxu0
    %386 = vmatprep.mubr.f32.mxu0 0.0
    %387 = vmatmul.mubr.f32.gmra.mxu0 %v267
    %v388 = vpop.f32.mrf.mxu0
    %v389 = vadd.f32 %v191, %v388
    %v390 = vpop.f32.mrf.mxu0
    %391 = vmatprep.mubr.f32.mxu0 0.0
    %392 = vmatmul.mubr.f32.gmra.mxu0 %v270
    %v393 = vpop.f32.mrf.mxu0
    %v394 = vadd.f32 %v196, %v393
    %v395 = vpop.f32.mrf.mxu0
    %396 = vmatprep.mubr.f32.mxu0 0.0
    %397 = vmatmul.mubr.f32.gmra.mxu0 %v273
    %v398 = vpop.f32.mrf.mxu0
    %v399 = vadd.f32 %v201, %v398
    %v400 = vpop.f32.mrf.mxu0
    %401 = vmatprep.mubr.f32.mxu0 0.0
    %402 = vmatmul.mubr.f32.gmra.mxu0 %v276
    %v403 = vpop.f32.mrf.mxu0
    %v404 = vadd.f32 %v206, %v403
    %v405 = vpop.f32.mrf.mxu0
    %406 = vmatprep.mubr.f32.mxu0 0.0
    %407 = vmatmul.mubr.f32.gmra.mxu0 %v279
    %v408 = vpop.f32.mrf.mxu0
    %v409 = vadd.f32 %v211, %v408
    %v410 = vpop.f32.mrf.mxu0
    %411 = vmatprep.mubr.f32.mxu0 0.0
    %412 = vmatmul.mubr.f32.gmra.mxu0 %v282
    %v413 = vpop.f32.mrf.mxu0
    %v414 = vadd.f32 %v216, %v413
    %v415 = vpop.f32.mrf.mxu0
    %416 = vmatprep.mubr.f32.mxu0 0.0
    %417 = vmatmul.mubr.f32.gmra.mxu0 %v285
    %v418 = vpop.f32.mrf.mxu0
    %v419 = vadd.f32 %v221, %v418
    %v420 = vpop.f32.mrf.mxu0
    %421 = vmatprep.mubr.f32.mxu0 0.0
    %422 = vmatmul.mubr.f32.gmra.mxu0 %v288
    %v423 = vpop.f32.mrf.mxu0
    %v424 = vadd.f32 %v226, %v423
    %v425 = vpop.f32.mrf.mxu0
    %426 = vmatprep.mubr.f32.mxu0 0.0
    %427 = vmatmul.mubr.f32.gmra.mxu0 %v291
    %v428 = vpop.f32.mrf.mxu0
    %v429 = vadd.f32 %v231, %v428
    %v430 = vpop.f32.mrf.mxu0
    %431 = vmatprep.mubr.f32.mxu0 0.0
    %432 = vmatmul.mubr.f32.gmra.mxu0 %v294
    %v433 = vpop.f32.mrf.mxu0
    %v434 = vadd.f32 %v236, %v433
    %v435 = vpop.f32.mrf.mxu0
    %436 = vmatprep.mubr.f32.mxu0 0.0
    %437 = vmatmul.mubr.f32.gmra.mxu0 %v297
    %v438 = vpop.f32.mrf.mxu0
    %v439 = vadd.f32 %v241, %v438
    %v440 = vpop.f32.mrf.mxu0
    %441 = vmatprep.mubr.f32.mxu0 0.0
    %442 = vmatmul.mubr.f32.gmra.mxu0 %v300
    %v443 = vpop.f32.mrf.mxu0
    %v444 = vadd.f32 %v246, %v443
    %v445 = vpop.f32.mrf.mxu0
    %446 = vmatprep.mubr.f32.mxu0 0.0
    %447 = vmatmul.mubr.f32.gmra.mxu0 %v303
    %v448 = vpop.f32.mrf.mxu0
    %v449 = vadd.f32 %v251, %v448
    %v450 = vpop.f32.mrf.mxu0
    %451 = vmatprep.mubr.f32.mxu0 0.0
    %452 = vmatmul.mubr.f32.gmra.mxu0 %v306
    %v453 = vpop.f32.mrf.mxu0
    %v454 = vadd.f32 %v256, %v453
    %v455 = vpop.f32.mrf.mxu0
    %456 = vdwg.mxu0
    %v457 = vld [vmem:[%s4] sm:$0xff]
    %v458 = vld [vmem:[%s4 + $0x8] sm:$0xff]
    %v459 = vld [vmem:[%s4 + $0x10] sm:$0xff]
    %v460 = vld [vmem:[%s4 + $0x18] sm:$0xff]
    %v461 = vld [vmem:[%s4 + $0x20] sm:$0xff]
    %v462 = vld [vmem:[%s4 + $0x28] sm:$0xff]
    %v463 = vld [vmem:[%s4 + $0x30] sm:$0xff]
    %v464 = vld [vmem:[%s4 + $0x38] sm:$0xff]
    %v465 = vld [vmem:[%s4 + $0x40] sm:$0xff]
    %v466 = vld [vmem:[%s4 + $0x48] sm:$0xff]
    %v467 = vld [vmem:[%s4 + $0x50] sm:$0xff]
    %v468 = vld [vmem:[%s4 + $0x58] sm:$0xff]
    %v469 = vld [vmem:[%s4 + $0x60] sm:$0xff]
    %v470 = vld [vmem:[%s4 + $0x68] sm:$0xff]
    %v471 = vld [vmem:[%s4 + $0x70] sm:$0xff]
    %v472 = vld [vmem:[%s4 + $0x78] sm:$0xff]
    %474 = vset.pattern.permute.xlu0 0
    %475 = vperm.xlu0 %474, %v457
    %v476 = vpop.permute.xlu0 %475
    %479 = vset.pattern.permute.xlu0 0
    %480 = vperm.xlu0 %479, %v458
    %v481 = vpop.permute.xlu0 %480
    %484 = vset.pattern.permute.xlu0 0
    %485 = vperm.xlu0 %484, %v459
    %v486 = vpop.permute.xlu0 %485
    %489 = vset.pattern.permute.xlu0 0
    %490 = vperm.xlu0 %489, %v460
    %v491 = vpop.permute.xlu0 %490
    %494 = vset.pattern.permute.xlu0 0
    %495 = vperm.xlu0 %494, %v461
    %v496 = vpop.permute.xlu0 %495
    %499 = vset.pattern.permute.xlu0 0
    %500 = vperm.xlu0 %499, %v462
    %v501 = vpop.permute.xlu0 %500
    %504 = vset.pattern.permute.xlu0 0
    %505 = vperm.xlu0 %504, %v463
    %v506 = vpop.permute.xlu0 %505
    %509 = vset.pattern.permute.xlu0 0
    %510 = vperm.xlu0 %509, %v464
    %v511 = vpop.permute.xlu0 %510
    %514 = vset.pattern.permute.xlu0 0
    %515 = vperm.xlu0 %514, %v465
    %v516 = vpop.permute.xlu0 %515
    %519 = vset.pattern.permute.xlu0 0
    %520 = vperm.xlu0 %519, %v466
    %v521 = vpop.permute.xlu0 %520
    %524 = vset.pattern.permute.xlu0 0
    %525 = vperm.xlu0 %524, %v467
    %v526 = vpop.permute.xlu0 %525
    %529 = vset.pattern.permute.xlu0 0
    %530 = vperm.xlu0 %529, %v468
    %v531 = vpop.permute.xlu0 %530
    %534 = vset.pattern.permute.xlu0 0
    %535 = vperm.xlu0 %534, %v469
    %v536 = vpop.permute.xlu0 %535
    %539 = vset.pattern.permute.xlu0 0
    %540 = vperm.xlu0 %539, %v470
    %v541 = vpop.permute.xlu0 %540
    %544 = vset.pattern.permute.xlu0 0
    %545 = vperm.xlu0 %544, %v471
    %v546 = vpop.permute.xlu0 %545
    %549 = vset.pattern.permute.xlu0 0
    %550 = vperm.xlu0 %549, %v472
    %v551 = vpop.permute.xlu0 %550
    %v553 = vadd.f32 %v379, %v476
    %v554 = vadd.f32 %v384, %v481
    %v555 = vadd.f32 %v389, %v486
    %v556 = vadd.f32 %v394, %v491
    %v557 = vadd.f32 %v399, %v496
    %v558 = vadd.f32 %v404, %v501
    %v559 = vadd.f32 %v409, %v506
    %v560 = vadd.f32 %v414, %v511
    %v561 = vadd.f32 %v419, %v516
    %v562 = vadd.f32 %v424, %v521
    %v563 = vadd.f32 %v429, %v526
    %v564 = vadd.f32 %v434, %v531
    %v565 = vadd.f32 %v439, %v536
    %v566 = vadd.f32 %v444, %v541
    %v567 = vadd.f32 %v449, %v546
    %v568 = vadd.f32 %v454, %v551
    %v569 = vmax.f32 %v553, 0.0
    %v570 = vmax.f32 %v554, 0.0
    %v571 = vmax.f32 %v555, 0.0
    %v572 = vmax.f32 %v556, 0.0
    %v573 = vmax.f32 %v557, 0.0
    %v574 = vmax.f32 %v558, 0.0
    %v575 = vmax.f32 %v559, 0.0
    %v576 = vmax.f32 %v560, 0.0
    %v577 = vmax.f32 %v561, 0.0
    %v578 = vmax.f32 %v562, 0.0
    %v579 = vmax.f32 %v563, 0.0
    %v580 = vmax.f32 %v564, 0.0
    %v581 = vmax.f32 %v565, 0.0
    %v582 = vmax.f32 %v566, 0.0
    %v583 = vmax.f32 %v567, 0.0
    %v584 = vmax.f32 %v568, 0.0
    %v585 = vand.u32 2147483647, %v553
    %v586 = vand.u32 2147483647, %v554
    %v587 = vand.u32 2147483647, %v555
    %v588 = vand.u32 2147483647, %v556
    %v589 = vand.u32 2147483647, %v557
    %v590 = vand.u32 2147483647, %v558
    %v591 = vand.u32 2147483647, %v559
    %v592 = vand.u32 2147483647, %v560
    %v593 = vand.u32 2147483647, %v561
    %v594 = vand.u32 2147483647, %v562
    %v595 = vand.u32 2147483647, %v563
    %v596 = vand.u32 2147483647, %v564
    %v597 = vand.u32 2147483647, %v565
    %v598 = vand.u32 2147483647, %v566
    %v599 = vand.u32 2147483647, %v567
    %v600 = vand.u32 2147483647, %v568
    %v601 = vsub.f32 0.0, %v585
    %v602 = vsub.f32 0.0, %v586
    %v603 = vsub.f32 0.0, %v587
    %v604 = vsub.f32 0.0, %v588
    %v605 = vsub.f32 0.0, %v589
    %v606 = vsub.f32 0.0, %v590
    %v607 = vsub.f32 0.0, %v591
    %v608 = vsub.f32 0.0, %v592
    %v609 = vsub.f32 0.0, %v593
    %v610 = vsub.f32 0.0, %v594
    %v611 = vsub.f32 0.0, %v595
    %v612 = vsub.f32 0.0, %v596
    %v613 = vsub.f32 0.0, %v597
    %v614 = vsub.f32 0.0, %v598
    %v615 = vsub.f32 0.0, %v599
    %v616 = vsub.f32 0.0, %v600
    %v617 = vmul.f32 %v601, 1.442695
    %v618 = vpow.pop %v617
    %v619 = vmul.f32 %v602, 1.442695
    %v620 = vpow.pop %v619
    %v621 = vmul.f32 %v603, 1.442695
    %v622 = vpow.pop %v621
    %v623 = vmul.f32 %v604, 1.442695
    %v624 = vpow.pop %v623
    %v625 = vmul.f32 %v605, 1.442695
    %v626 = vpow.pop %v625
    %v627 = vmul.f32 %v606, 1.442695
    %v628 = vpow.pop %v627
    %v629 = vmul.f32 %v607, 1.442695
    %v630 = vpow.pop %v629
    %v631 = vmul.f32 %v608, 1.442695
    %v632 = vpow.pop %v631
    %v633 = vmul.f32 %v609, 1.442695
    %v634 = vpow.pop %v633
    %v635 = vmul.f32 %v610, 1.442695
    %v636 = vpow.pop %v635
    %v637 = vmul.f32 %v611, 1.442695
    %v638 = vpow.pop %v637
    %v639 = vmul.f32 %v612, 1.442695
    %v640 = vpow.pop %v639
    %v641 = vmul.f32 %v613, 1.442695
    %v642 = vpow.pop %v641
    %v643 = vmul.f32 %v614, 1.442695
    %v644 = vpow.pop %v643
    %v645 = vmul.f32 %v615, 1.442695
    %v646 = vpow.pop %v645
    %v647 = vmul.f32 %v616, 1.442695
    %v648 = vpow.pop %v647
    %v649 = vadd.f32 %v618, 1.0
    %v650 = vlog2.pop %v649
    %v651 = vmul.f32 %v650, 0.6931472
    %v652 = vmul.f32 -0.5, %v618
    %v653 = vadd.f32 %v652, 1.0
    %v654 = vmul.f32 %v653, %v618
    %v655 = vand.u32 2147483647, %v618
    %vm656 = vcmp.lt.f32.partialorder %v655, 0.0004427343
    %v657 = vsel %vm656, %v654, %v651
    %v658 = vadd.f32 %v620, 1.0
    %v659 = vlog2.pop %v658
    %v660 = vmul.f32 %v659, 0.6931472
    %v661 = vmul.f32 -0.5, %v620
    %v662 = vadd.f32 %v661, 1.0
    %v663 = vmul.f32 %v662, %v620
    %v664 = vand.u32 2147483647, %v620
    %vm665 = vcmp.lt.f32.partialorder %v664, 0.0004427343
    %v666 = vsel %vm665, %v663, %v660
    %v667 = vadd.f32 %v622, 1.0
    %v668 = vlog2.pop %v667
    %v669 = vmul.f32 %v668, 0.6931472
    %v670 = vmul.f32 -0.5, %v622
    %v671 = vadd.f32 %v670, 1.0
    %v672 = vmul.f32 %v671, %v622
    %v673 = vand.u32 2147483647, %v622
    %vm674 = vcmp.lt.f32.partialorder %v673, 0.0004427343
    %v675 = vsel %vm674, %v672, %v669
    %v676 = vadd.f32 %v624, 1.0
    %v677 = vlog2.pop %v676
    %v678 = vmul.f32 %v677, 0.6931472
    %v679 = vmul.f32 -0.5, %v624
    %v680 = vadd.f32 %v679, 1.0
    %v681 = vmul.f32 %v680, %v624
    %v682 = vand.u32 2147483647, %v624
    %vm683 = vcmp.lt.f32.partialorder %v682, 0.0004427343
    %v684 = vsel %vm683, %v681, %v678
    %v685 = vadd.f32 %v626, 1.0
    %v686 = vlog2.pop %v685
    %v687 = vmul.f32 %v686, 0.6931472
    %v688 = vmul.f32 -0.5, %v626
    %v689 = vadd.f32 %v688, 1.0
    %v690 = vmul.f32 %v689, %v626
    %v691 = vand.u32 2147483647, %v626
    %vm692 = vcmp.lt.f32.partialorder %v691, 0.0004427343
    %v693 = vsel %vm692, %v690, %v687
    %v694 = vadd.f32 %v628, 1.0
    %v695 = vlog2.pop %v694
    %v696 = vmul.f32 %v695, 0.6931472
    %v697 = vmul.f32 -0.5, %v628
    %v698 = vadd.f32 %v697, 1.0
    %v699 = vmul.f32 %v698, %v628
    %v700 = vand.u32 2147483647, %v628
    %vm701 = vcmp.lt.f32.partialorder %v700, 0.0004427343
    %v702 = vsel %vm701, %v699, %v696
    %v703 = vadd.f32 %v630, 1.0
    %v704 = vlog2.pop %v703
    %v705 = vmul.f32 %v704, 0.6931472
    %v706 = vmul.f32 -0.5, %v630
    %v707 = vadd.f32 %v706, 1.0
    %v708 = vmul.f32 %v707, %v630
    %v709 = vand.u32 2147483647, %v630
    %vm710 = vcmp.lt.f32.partialorder %v709, 0.0004427343
    %v711 = vsel %vm710, %v708, %v705
    %v712 = vadd.f32 %v632, 1.0
    %v713 = vlog2.pop %v712
    %v714 = vmul.f32 %v713, 0.6931472
    %v715 = vmul.f32 -0.5, %v632
    %v716 = vadd.f32 %v715, 1.0
    %v717 = vmul.f32 %v716, %v632
    %v718 = vand.u32 2147483647, %v632
    %vm719 = vcmp.lt.f32.partialorder %v718, 0.0004427343
    %v720 = vsel %vm719, %v717, %v714
    %v721 = vadd.f32 %v634, 1.0
    %v722 = vlog2.pop %v721
    %v723 = vmul.f32 %v722, 0.6931472
    %v724 = vmul.f32 -0.5, %v634
    %v725 = vadd.f32 %v724, 1.0
    %v726 = vmul.f32 %v725, %v634
    %v727 = vand.u32 2147483647, %v634
    %vm728 = vcmp.lt.f32.partialorder %v727, 0.0004427343
    %v729 = vsel %vm728, %v726, %v723
    %v730 = vadd.f32 %v636, 1.0
    %v731 = vlog2.pop %v730
    %v732 = vmul.f32 %v731, 0.6931472
    %v733 = vmul.f32 -0.5, %v636
    %v734 = vadd.f32 %v733, 1.0
    %v735 = vmul.f32 %v734, %v636
    %v736 = vand.u32 2147483647, %v636
    %vm737 = vcmp.lt.f32.partialorder %v736, 0.0004427343
    %v738 = vsel %vm737, %v735, %v732
    %v739 = vadd.f32 %v638, 1.0
    %v740 = vlog2.pop %v739
    %v741 = vmul.f32 %v740, 0.6931472
    %v742 = vmul.f32 -0.5, %v638
    %v743 = vadd.f32 %v742, 1.0
    %v744 = vmul.f32 %v743, %v638
    %v745 = vand.u32 2147483647, %v638
    %vm746 = vcmp.lt.f32.partialorder %v745, 0.0004427343
    %v747 = vsel %vm746, %v744, %v741
    %v748 = vadd.f32 %v640, 1.0
    %v749 = vlog2.pop %v748
    %v750 = vmul.f32 %v749, 0.6931472
    %v751 = vmul.f32 -0.5, %v640
    %v752 = vadd.f32 %v751, 1.0
    %v753 = vmul.f32 %v752, %v640
    %v754 = vand.u32 2147483647, %v640
    %vm755 = vcmp.lt.f32.partialorder %v754, 0.0004427343
    %v756 = vsel %vm755, %v753, %v750
    %v757 = vadd.f32 %v642, 1.0
    %v758 = vlog2.pop %v757
    %v759 = vmul.f32 %v758, 0.6931472
    %v760 = vmul.f32 -0.5, %v642
    %v761 = vadd.f32 %v760, 1.0
    %v762 = vmul.f32 %v761, %v642
    %v763 = vand.u32 2147483647, %v642
    %vm764 = vcmp.lt.f32.partialorder %v763, 0.0004427343
    %v765 = vsel %vm764, %v762, %v759
    %v766 = vadd.f32 %v644, 1.0
    %v767 = vlog2.pop %v766
    %v768 = vmul.f32 %v767, 0.6931472
    %v769 = vmul.f32 -0.5, %v644
    %v770 = vadd.f32 %v769, 1.0
    %v771 = vmul.f32 %v770, %v644
    %v772 = vand.u32 2147483647, %v644
    %vm773 = vcmp.lt.f32.partialorder %v772, 0.0004427343
    %v774 = vsel %vm773, %v771, %v768
    %v775 = vadd.f32 %v646, 1.0
    %v776 = vlog2.pop %v775
    %v777 = vmul.f32 %v776, 0.6931472
    %v778 = vmul.f32 -0.5, %v646
    %v779 = vadd.f32 %v778, 1.0
    %v780 = vmul.f32 %v779, %v646
    %v781 = vand.u32 2147483647, %v646
    %vm782 = vcmp.lt.f32.partialorder %v781, 0.0004427343
    %v783 = vsel %vm782, %v780, %v777
    %v784 = vadd.f32 %v648, 1.0
    %v785 = vlog2.pop %v784
    %v786 = vmul.f32 %v785, 0.6931472
    %v787 = vmul.f32 -0.5, %v648
    %v788 = vadd.f32 %v787, 1.0
    %v789 = vmul.f32 %v788, %v648
    %v790 = vand.u32 2147483647, %v648
    %vm791 = vcmp.lt.f32.partialorder %v790, 0.0004427343
    %v792 = vsel %vm791, %v789, %v786
    %v793 = vadd.f32 %v569, %v657
    %v794 = vadd.f32 %v570, %v666
    %v795 = vadd.f32 %v571, %v675
    %v796 = vadd.f32 %v572, %v684
    %v797 = vadd.f32 %v573, %v693
    %v798 = vadd.f32 %v574, %v702
    %v799 = vadd.f32 %v575, %v711
    %v800 = vadd.f32 %v576, %v720
    %v801 = vadd.f32 %v577, %v729
    %v802 = vadd.f32 %v578, %v738
    %v803 = vadd.f32 %v579, %v747
    %v804 = vadd.f32 %v580, %v756
    %v805 = vadd.f32 %v581, %v765
    %v806 = vadd.f32 %v582, %v774
    %v807 = vadd.f32 %v583, %v783
    %v808 = vadd.f32 %v584, %v792
    %v809 = vld [vmem:[%s5] sm:$0xf]
    %v810 = vld [vmem:[%s6] sm:$0xf]
    %812 = vset.pattern.permute.xlu0 0
    %813 = vperm.xlu0 %812, %v810
    %v814 = vpop.permute.xlu0 %813
    %816 = vmatprep.subr.mxu0 0.0
    %817 = vmatpush1.msra.mxu0 %v808
    %818 = vmatprep.subr.mxu0 0.0
    %819 = vmatpush1.msra.mxu0 %v807
    %820 = vmatprep.subr.mxu0 0.0
    %821 = vmatpush1.msra.mxu0 %v806
    %822 = vmatprep.subr.mxu0 0.0
    %823 = vmatpush1.msra.mxu0 %v805
    %824 = vmatprep.subr.mxu0 0.0
    %825 = vmatpush1.msra.mxu0 %v804
    %826 = vmatprep.subr.mxu0 0.0
    %827 = vmatpush1.msra.mxu0 %v803
    %828 = vmatprep.subr.mxu0 0.0
    %829 = vmatpush1.msra.mxu0 %v802
    %830 = vmatprep.subr.mxu0 0.0
    %831 = vmatpush1.msra.mxu0 %v801
    %832 = vmatprep.subr.mxu0 0.0
    %833 = vmatpush1.msra.mxu0 %v800
    %834 = vmatprep.subr.mxu0 0.0
    %835 = vmatpush1.msra.mxu0 %v799
    %836 = vmatprep.subr.mxu0 0.0
    %837 = vmatpush1.msra.mxu0 %v798
    %838 = vmatprep.subr.mxu0 0.0
    %839 = vmatpush1.msra.mxu0 %v797
    %840 = vmatprep.subr.mxu0 0.0
    %841 = vmatpush1.msra.mxu0 %v796
    %842 = vmatprep.subr.mxu0 0.0
    %843 = vmatpush1.msra.mxu0 %v795
    %844 = vmatprep.subr.mxu0 0.0
    %845 = vmatpush1.msra.mxu0 %v794
    %846 = vmatprep.subr.mxu0 0.0
    %847 = vmatpush1.msra.mxu0 %v793
    %848 = vmatprep.subr.mxu0 0.0
    %849 = vmatpush2.msra.mxu0 0.0
    %850 = vmatprep.subr.mxu0 0.0
    %851 = vmatpush2.msra.mxu0 0.0
    %852 = vmatprep.subr.mxu0 0.0
    %853 = vmatpush2.msra.mxu0 0.0
    %854 = vmatprep.subr.mxu0 0.0
    %855 = vmatpush2.msra.mxu0 0.0
    %856 = vmatprep.subr.mxu0 0.0
    %857 = vmatpush2.msra.mxu0 0.0
    %858 = vmatprep.subr.mxu0 0.0
    %859 = vmatpush2.msra.mxu0 0.0
    %860 = vmatprep.subr.mxu0 0.0
    %861 = vmatpush2.msra.mxu0 0.0
    %862 = vmatprep.subr.mxu0 0.0
    %863 = vmatpush2.msra.mxu0 0.0
    %864 = vmatprep.subr.mxu0 0.0
    %865 = vmatpush2.msra.mxu0 0.0
    %866 = vmatprep.subr.mxu0 0.0
    %867 = vmatpush2.msra.mxu0 0.0
    %868 = vmatprep.subr.mxu0 0.0
    %869 = vmatpush2.msra.mxu0 0.0
    %870 = vmatprep.subr.mxu0 0.0
    %871 = vmatpush2.msra.mxu0 0.0
    %872 = vmatprep.subr.mxu0 0.0
    %873 = vmatpush2.msra.mxu0 0.0
    %874 = vmatprep.subr.mxu0 0.0
    %875 = vmatpush2.msra.mxu0 0.0
    %876 = vmatprep.subr.mxu0 0.0
    %877 = vmatpush2.msra.mxu0 0.0
    %878 = vmatprep.subr.mxu0 0.0
    %879 = vmatpush2.msra.mxu0 0.0
    %880 = vmatprep.mubr.f32.mxu0 0.0
    %881 = vmatmul.mubr.f32.gmra.mxu0 %v809
    %v882 = vpop.f32.mrf.mxu0
    %v883 = vadd.f32 %v814, %v882
    %v884 = vpop.f32.mrf.mxu0
    %885 = vdwg.mxu0
    %v886 = vmax.f32 %v883, 0.0
    %v887 = vand.u32 2147483647, %v883
    %v888 = vsub.f32 0.0, %v887
    %v889 = vmul.f32 %v888, 1.442695
    %v890 = vpow.pop %v889
    %v891 = vadd.f32 %v890, 1.0
    %v892 = vlog2.pop %v891
    %v893 = vmul.f32 %v892, 0.6931472
    %v894 = vmul.f32 -0.5, %v890
    %v895 = vadd.f32 %v894, 1.0
    %v896 = vmul.f32 %v895, %v890
    %v897 = vand.u32 2147483647, %v890
    %vm898 = vcmp.lt.f32.partialorder %v897, 0.0004427343
    %v899 = vsel %vm898, %v896, %v893
    %v900 = vadd.f32 %v886, %v899
    %vm901 = vcmask 60416
    %902 = vst.msk [vmem:[#allocation2] sm:$0xf] %vm901, %v900
    // Predicated region
    $region30: #{diagonal_variance.1} parent=1 // pred_check
      _
    $region31: #{diagonal_variance.1} parent=1 // pred_check_branch
      %904 = sbr.rel (0) target = $region33
    $region32: #{diagonal_variance.1} parent=1 // pred_region
      %s906 = ssub.s32 64, 64
      %907 = vsyncadd [#allocation3], %s906
      %s909 = sshll.u32 [#allocation2], 4
      %s910 = int_to_ptr.vmem [resolvable:$true] %s909
      %912 = dma.vmem_to_hbm [thread:$0]  %s910, 64, %s7, [#allocation3]
    $region33: #{diagonal_variance.1} parent=1 // pred_fallthru
      _
    // Predicated region
    $region34: #{diagonal_variance.1} parent=1 // pred_check
      _
    $region35: #{diagonal_variance.1} parent=1 // pred_check_branch
      %914 = sbr.rel (0) target = $region37
    $region36: #{diagonal_variance.1} parent=1 // pred_region
      %915 = dma.done [#allocation3], 64
    $region37: #{diagonal_variance.1} parent=1 // pred_fallthru
      _
    %916 = vsyncpa [#allocation3], 1

</llo_original>
